<compile_context>
chip_gen: v7x
topology: tpu7x:2x2x1
jax: 0.10.0
libtpu: 0.0.40
codegen_flags: <defaults>
</compile_context>

<pallas_src>
import jax
import jax.numpy as jnp
from jax.experimental import pallas as pl
from jax.experimental.pallas import tpu as pltpu

_LANES = 128
_SUBLANES = 8
_MIB = 1 << 20
_SUB_ROWS = 1024  # inner fori_loop sub-chunk (multiple of 8/16/32 packings)


def _round_up(v: int, m: int) -> int:
    return ((v + m - 1) // m) * m


def _sublane_packing(*dtypes) -> int:
    """Rows per (8,128) register tile: f32 -> 8, bf16 -> 16, int8/fp8 -> 32."""
    min_bytes = min(jnp.dtype(d).itemsize for d in dtypes)
    return 8 * max(1, 4 // int(min_bytes))


def _vmem_capacity_bytes() -> int:
    try:
        cap = getattr(pltpu.get_tpu_info(), "vmem_capacity_bytes", None)
        if cap:
            return int(cap)
    except Exception:
        pass
    return 64 * _MIB  # conservative default (v7x per-core VMEM)


def _make_sc_kernel(*, rows: int, tm: int, sub: int, steps: int, needs_mask: bool):
    """Build the accumulation kernel; all tiling parameters are static."""
    trips = tm // sub

    def kernel(x_ref, y_ref, acc_ref):
        pi = pl.program_id(0)
        i = pl.program_id(1)

        @pl.when(i == 0)
        def _init():
            acc_ref[...] = jnp.zeros(acc_ref.shape, acc_ref.dtype)

        # Unclamped global row offset of this block (steps/tm are static ints).
        row0 = (pi * steps + i) * tm

        def accumulate(masked: bool):
            def body(j, carry):
                num, den = carry
                off = pl.multiple_of(j * sub, sub)
                x = x_ref[pl.ds(off, sub), :].astype(jnp.float32)
                y = y_ref[pl.ds(off, sub), :].astype(jnp.float32)
                if masked:
                    # Zero out rows beyond the valid range BEFORE any
                    # arithmetic so stale VMEM (possibly NaN bits) in partial
                    # or clamped blocks cannot contribute.
                    gid = row0 + off + jax.lax.broadcasted_iota(
                        jnp.int32, (sub, _LANES), 0)
                    valid = gid < rows
                    x = jnp.where(valid, x, 0.0)
                    y = jnp.where(valid, y, 0.0)
                d = y - x
                # (sub,128) -> (sub/8, 8, 128); summing axis 0 is pure VPU
                # elementwise vreg accumulation (no cross-lane XLU work) and
                # keeps 1024 independent partial sums for accuracy.
                num = num + jnp.sum((d * d).reshape(-1, _SUBLANES, _LANES), axis=0)
                den = den + jnp.sum((y * y).reshape(-1, _SUBLANES, _LANES), axis=0)
                return num, den

            zero = jnp.zeros((_SUBLANES, _LANES), jnp.float32)
            num, den = jax.lax.fori_loop(0, trips, body, (zero, zero))
            acc_ref[0, 0] += num
            acc_ref[0, 1] += den

        if needs_mask:
            is_edge = row0 + tm > rows

            @pl.when(is_edge)
            def _edge():
                accumulate(True)

            @pl.when(jnp.logical_not(is_edge))
            def _interior():
                accumulate(False)
        else:
            accumulate(False)

    return kernel


def spectral_convergence_loss(
    x_mag: jax.Array,
    y_mag: jax.Array,
    *,
    small_input_fallback_bytes: int = _MIB,
) -> jax.Array:
    """Frobenius-norm spectral convergence loss (Pallas TPU reduction kernel)."""
    assert x_mag.shape == y_mag.shape, "x_mag and y_mag must have the same shape"
    out_dtype = jnp.result_type(x_mag.dtype, y_mag.dtype)

    x_flat = x_mag.reshape(-1)
    y_flat = y_mag.reshape(-1)
    n = x_flat.shape[0]
    itemsize_x = jnp.dtype(x_flat.dtype).itemsize
    itemsize_y = jnp.dtype(y_flat.dtype).itemsize

    rows = n // _LANES
    if rows == 0 or n * (itemsize_x + itemsize_y) < small_input_fallback_bytes:
        # Tiny inputs: pallas_call launch overhead dominates, pure XLA wins.
        d = (y_flat.astype(jnp.float32) - x_flat.astype(jnp.float32))
        yf = y_flat.astype(jnp.float32)
        return (jnp.sqrt(jnp.sum(d * d)) / jnp.sqrt(jnp.sum(yf * yf))).astype(out_dtype)

    main_n = rows * _LANES

    # ---- tiling (all static Python ints) ----------------------------------
    packing = _sublane_packing(x_flat.dtype, y_flat.dtype)
    itemsize = max(itemsize_x, itemsize_y)
    vmem_cap = _vmem_capacity_bytes()
    # ~8 MiB per input tile (vmem_cap//8 on v7x's 64 MiB VMEM, capped at 8 MiB
    # elsewhere): 2 inputs x 2 pipeline buffers = 32 MiB of streaming buffers.
    per_tile_bytes = max(2 * _MIB, min(8 * _MIB, vmem_cap // 8))
    tm_cap = max(packing,
                 (per_tile_bytes // (_LANES * itemsize)) // packing * packing)

    tm = min(tm_cap, _round_up(rows, packing))
    sub = min(_SUB_ROWS, tm)          # inner sub-chunk; bounds f32 temporaries
    tm = max(sub, (tm // sub) * sub)  # sub evenly divides tm

    total_blocks = pl.cdiv(rows, tm)
    # Split rows across 2 chunks only when each chunk gets several full tiles;
    # on 1-TC chips this is then cost-neutral, on megacore chips it lets the
    # "parallel" axis shard the streaming across both TensorCores.
    p = 2 if total_blocks >= 8 else 1
    steps = pl.cdiv(total_blocks, p)
    last_block = total_blocks - 1
    needs_mask = (p * steps * tm) != rows

    # ---- operands (no full-array pad; aligned case is a free bitcast) ------
    if main_n == n:
        x2 = x_flat.reshape(rows, _LANES)
        y2 = y_flat.reshape(rows, _LANES)
    else:
        # Sub-128-element tail is handled in the jnp epilogue below.  The
        # prefix slice may cost one HBM copy for unaligned inputs (still no
        # padded-write traffic).
        # TODO(synk): fully copy-free unaligned path via a 2-D column-masked view.
        x2 = jax.lax.slice(x_flat, (0,), (main_n,)).reshape(rows, _LANES)
        y2 = jax.lax.slice(y_flat, (0,), (main_n,)).reshape(rows, _LANES)

    # ---- VMEM budget & scheduling hints ------------------------------------
    tile_in_bytes = tm * _LANES * itemsize
    sub_tmp_bytes = 8 * sub * _LANES * 4      # f32 casts + products + carries
    vmem_limit = 4 * tile_in_bytes + sub_tmp_bytes + 8 * _MIB
    vmem_limit = min(max(vmem_limit, 32 * _MIB), max(32 * _MIB, (vmem_cap * 3) // 4))

    cost = pl.CostEstimate(
        flops=5 * main_n,
        transcendentals=0,
        bytes_accessed=main_n * (itemsize_x + itemsize_y) + p * 2 * _SUBLANES * _LANES * 4,
    )

    def in_index(pi, i):
        # Clamp so a (rare) fully-out-of-range step re-reads the last block;
        # its contribution is zeroed by the in-kernel mask.
        return (jnp.minimum(pi * steps + i, last_block), 0)

    kernel = _make_sc_kernel(rows=rows, tm=tm, sub=sub, steps=steps,
                             needs_mask=needs_mask)

    acc = pl.pallas_call(
        kernel,
        out_shape=jax.ShapeDtypeStruct((p, 2, _SUBLANES, _LANES), jnp.float32),
        grid_spec=pltpu.PrefetchScalarGridSpec(
            num_scalar_prefetch=0,
            grid=(p, steps),
            in_specs=[
                pl.BlockSpec((tm, _LANES), in_index),
                pl.BlockSpec((tm, _LANES), in_index),
            ],
            out_specs=pl.BlockSpec(
                (1, 2, _SUBLANES, _LANES), lambda pi, i: (pi, 0, 0, 0)),
        ),
        compiler_params=pltpu.CompilerParams(
            dimension_semantics=("parallel", "arbitrary"),
            vmem_limit_bytes=int(vmem_limit),
        ),
        cost_estimate=cost,
    )(x2, y2)

    num = jnp.sum(acc[:, 0])
    den = jnp.sum(acc[:, 1])

    if main_n != n:
        # Sub-128-element tail (< 1 vreg row) folded into the epilogue.
        xt = x_flat[main_n:].astype(jnp.float32)
        yt = y_flat[main_n:].astype(jnp.float32)
        dt = yt - xt
        num = num + jnp.sum(dt * dt)
        den = den + jnp.sum(yt * yt)

    # Note: ||y||_F == 0 yields inf/nan, matching torch.norm semantics.
    return (jnp.sqrt(num) / jnp.sqrt(den)).astype(out_dtype)


if __name__ == "__main__":
    key = jax.random.PRNGKey(0)

    def ref(x, y):
        xf = x.astype(jnp.float32).reshape(-1)
        yf = y.astype(jnp.float32).reshape(-1)
        return jnp.linalg.norm(yf - xf) / jnp.linalg.norm(yf)

    k1, k2, k3, k4, k5, k6 = jax.random.split(key, 6)

    # Case 1: lane-aligned STFT-magnitude-like shape (n % 128 == 0, zero-copy path).
    x1 = jnp.abs(jax.random.normal(k1, (2, 64, 128), dtype=jnp.float32))
    y1 = jnp.abs(jax.random.normal(k2, (2, 64, 128), dtype=jnp.float32))
    out1 = jax.block_until_ready(
        spectral_convergence_loss(x1, y1, small_input_fallback_bytes=0))
    assert jnp.allclose(out1, ref(x1, y1), rtol=1e-5, atol=1e-6), (out1, ref(x1, y1))

    # Case 2: awkward shape (n % 128 != 0) exercising edge masking + tail epilogue.
    x2 = jnp.abs(jax.random.normal(k3, (2, 63, 100), dtype=jnp.float32))
    y2 = jnp.abs(jax.random.normal(k4, (2, 63, 100), dtype=jnp.float32))
    out2 = jax.block_until_ready(
        spectral_convergence_loss(x2, y2, small_input_fallback_bytes=0))
    assert jnp.allclose(out2, ref(x2, y2), rtol=1e-5, atol=1e-6), (out2, ref(x2, y2))

    # Case 3: bf16 inputs exercising the dtype-aware sublane packing (16 rows).
    x3 = jnp.abs(jax.random.normal(k5, (4, 80, 256), dtype=jnp.float32)).astype(jnp.bfloat16)
    y3 = jnp.abs(jax.random.normal(k6, (4, 80, 256), dtype=jnp.float32)).astype(jnp.bfloat16)
    out3 = jax.block_until_ready(
        spectral_convergence_loss(x3, y3, small_input_fallback_bytes=0))
    assert jnp.allclose(out3.astype(jnp.float32), ref(x3, y3), rtol=2e-2, atol=1e-3), (
        out3, ref(x3, y3))

    print("KERNEL_OK")
</pallas_src>

<mosaic_0001>
module attributes {stable_mosaic.version = 11 : i64} {
  func.func @kernel(%arg0: i32, %arg1: i32, %arg2: memref<128x128xf32, #tpu.memory_space<vmem>>, %arg3: memref<128x128xf32, #tpu.memory_space<vmem>>, %arg4: memref<1x2x8x128xf32, #tpu.memory_space<vmem>>) attributes {dimension_semantics = [#tpu.dimension_semantics<parallel>, #tpu.dimension_semantics<arbitrary>], iteration_bounds = array<i64: 1, 1>, scalar_prefetch = 0 : i64, scratch_operands = 0 : i64, tpu.core_type = #tpu.core_type<tc>, window_params = [{transform_indices = @transform_0, window_bounds = array<i64: 128, 128>}, {transform_indices = @transform_1, window_bounds = array<i64: 128, 128>}, {transform_indices = @transform_2, window_bounds = array<i64: 1, 2, 8, 128>}]} {
    %c0_i32 = arith.constant 0 : i32
    %0 = arith.cmpi eq, %arg1, %c0_i32 : i32
    %1 = arith.extui %0 : i1 to i32
    %c0_i32_0 = arith.constant 0 : i32
    %2 = arith.cmpi ne, %1, %c0_i32_0 : i32
    scf.if %2 {
      %cst_20 = arith.constant 0.000000e+00 : f32
      %31 = vector.broadcast %cst_20 : f32 to vector<1x2x8x128xf32>
      %c0_21 = arith.constant 0 : index
      %c0_22 = arith.constant 0 : index
      %c0_23 = arith.constant 0 : index
      %c0_24 = arith.constant 0 : index
      %32 = vector.load %arg4[%c0_21, %c0_22, %c0_23, %c0_24] : memref<1x2x8x128xf32, #tpu.memory_space<vmem>>, vector<1x2x8x128xf32>
      tpu.vector_store %arg4[%c0_21, %c0_22, %c0_23, %c0_24], %31 {strides = array<i32>} : memref<1x2x8x128xf32, #tpu.memory_space<vmem>>, vector<1x2x8x128xf32>,
    } else {
    }
    %cst = arith.constant 0.000000e+00 : f32
    %3 = vector.broadcast %cst : f32 to vector<8x128xf32>
    %c0_i32_1 = arith.constant 0 : i32
    %c128_i32 = arith.constant 128 : i32
    %4 = arith.muli %c0_i32_1, %c128_i32 : i32
    %5 = tpu.assume_multiple %4, 128 : i32
    %6 = arith.index_cast %5 : i32 to index
    %c0 = arith.constant 0 : index
    %7 = vector.load %arg2[%6, %c0] : memref<128x128xf32, #tpu.memory_space<vmem>>, vector<128x128xf32>
    %8 = arith.index_cast %5 : i32 to index
    %c0_2 = arith.constant 0 : index
    %9 = vector.load %arg3[%8, %c0_2] : memref<128x128xf32, #tpu.memory_space<vmem>>, vector<128x128xf32>
    %10 = arith.subf %9, %7 : vector<128x128xf32>
    %11 = arith.mulf %10, %10 : vector<128x128xf32>
    %12 = vector.shape_cast %11 : vector<128x128xf32> to vector<16x8x128xf32>
    %cst_3 = arith.constant dense<0.000000e+00> : vector<8x128xf32>
    %13 = vector.multi_reduction <add>, %12, %cst_3 [0] : vector<16x8x128xf32> to vector<8x128xf32>
    %14 = arith.addf %3, %13 : vector<8x128xf32>
    %15 = arith.mulf %9, %9 : vector<128x128xf32>
    %16 = vector.shape_cast %15 : vector<128x128xf32> to vector<16x8x128xf32>
    %cst_4 = arith.constant dense<0.000000e+00> : vector<8x128xf32>
    %17 = vector.multi_reduction <add>, %16, %cst_4 [0] : vector<16x8x128xf32> to vector<8x128xf32>
    %18 = arith.addf %3, %17 : vector<8x128xf32>
    %c1_i32 = arith.constant 1 : i32
    %c0_5 = arith.constant 0 : index
    %c0_6 = arith.constant 0 : index
    %c0_7 = arith.constant 0 : index
    %c0_8 = arith.constant 0 : index
    %19 = vector.load %arg4[%c0_5, %c0_6, %c0_7, %c0_8] : memref<1x2x8x128xf32, #tpu.memory_space<vmem>>, vector<1x1x8x128xf32>
    %20 = vector.shape_cast %19 : vector<1x1x8x128xf32> to vector<8x128xf32>
    %21 = arith.addf %20, %14 : vector<8x128xf32>
    %c0_9 = arith.constant 0 : index
    %c0_10 = arith.constant 0 : index
    %c0_11 = arith.constant 0 : index
    %c0_12 = arith.constant 0 : index
    %22 = vector.load %arg4[%c0_9, %c0_10, %c0_11, %c0_12] : memref<1x2x8x128xf32, #tpu.memory_space<vmem>>, vector<1x1x8x128xf32>
    %23 = vector.shape_cast %22 : vector<1x1x8x128xf32> to vector<8x128xf32>
    %24 = vector.shape_cast %21 : vector<8x128xf32> to vector<1x1x8x128xf32>
    tpu.vector_store %arg4[%c0_9, %c0_10, %c0_11, %c0_12], %24 {strides = array<i32>} : memref<1x2x8x128xf32, #tpu.memory_space<vmem>>, vector<1x1x8x128xf32>,
    %c0_13 = arith.constant 0 : index
    %c1 = arith.constant 1 : index
    %c0_14 = arith.constant 0 : index
    %c0_15 = arith.constant 0 : index
    %25 = vector.load %arg4[%c0_13, %c1, %c0_14, %c0_15] : memref<1x2x8x128xf32, #tpu.memory_space<vmem>>, vector<1x1x8x128xf32>
    %26 = vector.shape_cast %25 : vector<1x1x8x128xf32> to vector<8x128xf32>
    %27 = arith.addf %26, %18 : vector<8x128xf32>
    %c0_16 = arith.constant 0 : index
    %c1_17 = arith.constant 1 : index
    %c0_18 = arith.constant 0 : index
    %c0_19 = arith.constant 0 : index
    %28 = vector.load %arg4[%c0_16, %c1_17, %c0_18, %c0_19] : memref<1x2x8x128xf32, #tpu.memory_space<vmem>>, vector<1x1x8x128xf32>
    %29 = vector.shape_cast %28 : vector<1x1x8x128xf32> to vector<8x128xf32>
    %30 = vector.shape_cast %27 : vector<8x128xf32> to vector<1x1x8x128xf32>
    tpu.vector_store %arg4[%c0_16, %c1_17, %c0_18, %c0_19], %30 {strides = array<i32>} : memref<1x2x8x128xf32, #tpu.memory_space<vmem>>, vector<1x1x8x128xf32>,
    return
  }
  func.func @transform_0(%arg0: i32, %arg1: i32) -> (i32, i32) {
    %c1_i32 = arith.constant 1 : i32
    %0 = arith.muli %arg0, %c1_i32 : i32
    %1 = arith.addi %0, %arg1 : i32
    %c0_i32 = arith.constant 0 : i32
    %2 = arith.minsi %1, %c0_i32 : i32
    %c0_i32_0 = arith.constant 0 : i32
    %c0_i32_1 = arith.constant 0 : i32
    return %2, %c0_i32_0 : i32, i32
  }
  func.func @transform_1(%arg0: i32, %arg1: i32) -> (i32, i32) {
    %c1_i32 = arith.constant 1 : i32
    %0 = arith.muli %arg0, %c1_i32 : i32
    %1 = arith.addi %0, %arg1 : i32
    %c0_i32 = arith.constant 0 : i32
    %2 = arith.minsi %1, %c0_i32 : i32
    %c0_i32_0 = arith.constant 0 : i32
    %c0_i32_1 = arith.constant 0 : i32
    return %2, %c0_i32_0 : i32, i32
  }
  func.func @transform_2(%arg0: i32, %arg1: i32) -> (i32, i32, i32, i32) {
    %c0_i32 = arith.constant 0 : i32
    %c0_i32_0 = arith.constant 0 : i32
    %c0_i32_1 = arith.constant 0 : i32
    %c0_i32_2 = arith.constant 0 : i32
    return %arg0, %c0_i32, %c0_i32_0, %c0_i32_1 : i32, i32, i32, i32
  }
}

</mosaic_0001>

<llo_original>
// kernel: tpu_custom_call.1
$region0: #{tpu_custom_call.1}
  #allocation0 [shape = 'u32[]', space=smem, size = 0x4, offset = 0x4, fixed_abs, tag = 'smem constant byte address 0x4 - core index']
  #allocation1 [shape = 'u32[144,128]{1,0:T(1,128)}', space=vmem, size = 0x12000, scoped, tag = 'internal scratch']
  %s0 = inlined_call_operand.hbm [shape: f32[128,128], index: 0, kind: input, shape index: {}]
  %s1 = inlined_call_operand.hbm [shape: f32[128,128], index: 1, kind: input, shape index: {}]
  %s2 = inlined_call_operand.hbm [shape: f32[1,2,8,128], index: 2, kind: output, shape index: {}]
  %s3 = sld [smem:[#allocation0]]
  $region30: #{tpu_custom_call.1} parent=0
    _
  %s5 = ssub.s32 1, %s3
  %s6 = scalar_select 0, %s5, %s3
  $region1: #{tpu_custom_call.1} parent=0
    #allocation2 [shape = 'u8[65536]{0}', space=vmem, size = 0x10000, scoped, tag = 'input window, operand 0, single buffered']
    #allocation3 [shape = 's32[1]{0}', space=sflag, size = 0x4, scoped, tag = 'scoped memory for tpu_custom_call.1']
    #allocation4 [shape = 's32[1]{0}', space=sflag, size = 0x4, scoped, tag = 'scoped memory for tpu_custom_call.1']
    #allocation5 [shape = 'u8[65536]{0}', space=vmem, size = 0x10000, scoped, tag = 'input window, operand 1, single buffered']
    #allocation6 [shape = 's32[1]{0}', space=sflag, size = 0x4, scoped, tag = 'scoped memory for tpu_custom_call.1']
    #allocation7 [shape = 'u8[8192]{0}', space=vmem, size = 0x2000, scoped, tag = 'output window, operand 0, single buffered']
    %7 = vsyncpa [#allocation3], 0
    %8 = vsyncpa [#allocation6], 0
    %9 = vsyncpa [#allocation4], 0
    // Predicated region
    $region2: #{tpu_custom_call.1} parent=1 // pred_check
      _
    $region3: #{tpu_custom_call.1} parent=1 // pred_check_branch
      %11 = sbr.rel (0) target = $region5
    $region4: #{tpu_custom_call.1} parent=1 // pred_region
      %s12 = sadd.s32 0, 0
      %p13 = scmp.lt.s32.totalorder %s12, 0
      %s14 = scalar_select %p13, %s12, 0
      %s15 = smul.u32 16, %s14
      %s17 = ssub.s32 2048, 2048
      %18 = vsyncadd [#allocation3], %s17
      %s19 = smul.addr %s15, 128
      %s20 = scalar_lea.hbm %s0, %s19
      %s21 = sshll.u32 [#allocation2], 4
      %s22 = int_to_ptr.vmem [resolvable:$true] %s21
      %27 = dma.hbm_to_vmem [thread:$0]  %s20, 2048, %s22, [#allocation3], 128, 128, 8
    $region5: #{tpu_custom_call.1} parent=1 // pred_fallthru
      _
    // Predicated region
    $region6: #{tpu_custom_call.1} parent=1 // pred_check
      _
    $region7: #{tpu_custom_call.1} parent=1 // pred_check_branch
      %29 = sbr.rel (0) target = $region9
    $region8: #{tpu_custom_call.1} parent=1 // pred_region
      %s30 = sadd.s32 0, 0
      %p31 = scmp.lt.s32.totalorder %s30, 0
      %s32 = scalar_select %p31, %s30, 0
      %s33 = smul.u32 16, %s32
      %s35 = ssub.s32 2048, 2048
      %36 = vsyncadd [#allocation6], %s35
      %s37 = smul.addr %s33, 128
      %s38 = scalar_lea.hbm %s1, %s37
      %s39 = sshll.u32 [#allocation5], 4
      %s40 = int_to_ptr.vmem [resolvable:$true] %s39
      %45 = dma.hbm_to_vmem [thread:$0]  %s38, 2048, %s40, [#allocation6], 128, 128, 8
    $region9: #{tpu_custom_call.1} parent=1 // pred_fallthru
      _
    // Predicated region
    $region10: #{tpu_custom_call.1} parent=1 // pred_check
      _
    $region11: #{tpu_custom_call.1} parent=1 // pred_check_branch
      %47 = sbr.rel (0) target = $region13
    $region12: #{tpu_custom_call.1} parent=1 // pred_region
      %48 = dma.done [#allocation3], 2048
    $region13: #{tpu_custom_call.1} parent=1 // pred_fallthru
      _
    // Predicated region
    $region14: #{tpu_custom_call.1} parent=1 // pred_check
      _
    $region15: #{tpu_custom_call.1} parent=1 // pred_check_branch
      %50 = sbr.rel (0) target = $region17
    $region16: #{tpu_custom_call.1} parent=1 // pred_region
      %51 = dma.done [#allocation6], 2048
    $region17: #{tpu_custom_call.1} parent=1 // pred_fallthru
      _
    %s52 = sadd.s32 0, 0
    %p53 = scmp.lt.s32.totalorder %s52, 0
    %s54 = scalar_select %p53, %s52, 0
    %s55 = smul.u32 16, %s54
    %s56 = sadd.s32 0, 0
    %p57 = scmp.lt.s32.totalorder %s56, 0
    %s58 = scalar_select %p57, %s56, 0
    %s59 = smul.u32 16, %s58
    %p60 = scmp.eq.s32.totalorder 0, 0
    // Predicated region
    $region18: #{tpu_custom_call.1} parent=1 // pred_check
      %p61 = pneg %p60
    $region19: #{tpu_custom_call.1} parent=1 // pred_check_branch
      %63 = sbr.rel (%p61) target = $region21
    $region20: #{tpu_custom_call.1} parent=1 // pred_region
      %64 = vst [vmem:[#allocation7] sm:$0xff] 0.0
      %65 = vst [vmem:[#allocation7 + $0x8] sm:$0xff] 0.0
    $region21: #{tpu_custom_call.1} parent=1 // pred_fallthru
      _
    %v66 = vld [vmem:[#allocation2] sm:$0xff]
    %v67 = vld [vmem:[#allocation2 + $0x8] sm:$0xff]
    %v68 = vld [vmem:[#allocation2 + $0x10] sm:$0xff]
    %v69 = vld [vmem:[#allocation2 + $0x18] sm:$0xff]
    %v70 = vld [vmem:[#allocation2 + $0x20] sm:$0xff]
    %v71 = vld [vmem:[#allocation2 + $0x28] sm:$0xff]
    %v72 = vld [vmem:[#allocation2 + $0x30] sm:$0xff]
    %v73 = vld [vmem:[#allocation2 + $0x38] sm:$0xff]
    %v74 = vld [vmem:[#allocation2 + $0x40] sm:$0xff]
    %v75 = vld [vmem:[#allocation2 + $0x48] sm:$0xff]
    %v76 = vld [vmem:[#allocation2 + $0x50] sm:$0xff]
    %v77 = vld [vmem:[#allocation2 + $0x58] sm:$0xff]
    %v78 = vld [vmem:[#allocation2 + $0x60] sm:$0xff]
    %v79 = vld [vmem:[#allocation2 + $0x68] sm:$0xff]
    %v80 = vld [vmem:[#allocation2 + $0x70] sm:$0xff]
    %v81 = vld [vmem:[#allocation2 + $0x78] sm:$0xff]
    %v82 = vld [vmem:[#allocation5] sm:$0xff]
    %v83 = vld [vmem:[#allocation5 + $0x8] sm:$0xff]
    %v84 = vld [vmem:[#allocation5 + $0x10] sm:$0xff]
    %v85 = vld [vmem:[#allocation5 + $0x18] sm:$0xff]
    %v86 = vld [vmem:[#allocation5 + $0x20] sm:$0xff]
    %v87 = vld [vmem:[#allocation5 + $0x28] sm:$0xff]
    %v88 = vld [vmem:[#allocation5 + $0x30] sm:$0xff]
    %v89 = vld [vmem:[#allocation5 + $0x38] sm:$0xff]
    %v90 = vld [vmem:[#allocation5 + $0x40] sm:$0xff]
    %v91 = vld [vmem:[#allocation5 + $0x48] sm:$0xff]
    %v92 = vld [vmem:[#allocation5 + $0x50] sm:$0xff]
    %v93 = vld [vmem:[#allocation5 + $0x58] sm:$0xff]
    %v94 = vld [vmem:[#allocation5 + $0x60] sm:$0xff]
    %v95 = vld [vmem:[#allocation5 + $0x68] sm:$0xff]
    %v96 = vld [vmem:[#allocation5 + $0x70] sm:$0xff]
    %v97 = vld [vmem:[#allocation5 + $0x78] sm:$0xff]
    %v98 = vsub.f32 %v82, %v66
    %v99 = vsub.f32 %v83, %v67
    %v100 = vsub.f32 %v84, %v68
    %v101 = vsub.f32 %v85, %v69
    %v102 = vsub.f32 %v86, %v70
    %v103 = vsub.f32 %v87, %v71
    %v104 = vsub.f32 %v88, %v72
    %v105 = vsub.f32 %v89, %v73
    %v106 = vsub.f32 %v90, %v74
    %v107 = vsub.f32 %v91, %v75
    %v108 = vsub.f32 %v92, %v76
    %v109 = vsub.f32 %v93, %v77
    %v110 = vsub.f32 %v94, %v78
    %v111 = vsub.f32 %v95, %v79
    %v112 = vsub.f32 %v96, %v80
    %v113 = vsub.f32 %v97, %v81
    %v114 = vmul.f32 %v98, %v98
    %v115 = vmul.f32 %v99, %v99
    %v116 = vmul.f32 %v100, %v100
    %v117 = vmul.f32 %v101, %v101
    %v118 = vmul.f32 %v102, %v102
    %v119 = vmul.f32 %v103, %v103
    %v120 = vmul.f32 %v104, %v104
    %v121 = vmul.f32 %v105, %v105
    %v122 = vmul.f32 %v106, %v106
    %v123 = vmul.f32 %v107, %v107
    %v124 = vmul.f32 %v108, %v108
    %v125 = vmul.f32 %v109, %v109
    %v126 = vmul.f32 %v110, %v110
    %v127 = vmul.f32 %v111, %v111
    %v128 = vmul.f32 %v112, %v112
    %v129 = vmul.f32 %v113, %v113
    %v130 = vadd.f32 %v114, %v115
    %v131 = vadd.f32 %v130, %v116
    %v132 = vadd.f32 %v131, %v117
    %v133 = vadd.f32 %v132, %v118
    %v134 = vadd.f32 %v133, %v119
    %v135 = vadd.f32 %v134, %v120
    %v136 = vadd.f32 %v135, %v121
    %v137 = vadd.f32 %v136, %v122
    %v138 = vadd.f32 %v137, %v123
    %v139 = vadd.f32 %v138, %v124
    %v140 = vadd.f32 %v139, %v125
    %v141 = vadd.f32 %v140, %v126
    %v142 = vadd.f32 %v141, %v127
    %v143 = vadd.f32 %v142, %v128
    %v144 = vadd.f32 %v143, %v129
    %v145 = vadd.f32 %v144, 0.0
    %v146 = vmul.f32 %v82, %v82
    %v147 = vmul.f32 %v83, %v83
    %v148 = vmul.f32 %v84, %v84
    %v149 = vmul.f32 %v85, %v85
    %v150 = vmul.f32 %v86, %v86
    %v151 = vmul.f32 %v87, %v87
    %v152 = vmul.f32 %v88, %v88
    %v153 = vmul.f32 %v89, %v89
    %v154 = vmul.f32 %v90, %v90
    %v155 = vmul.f32 %v91, %v91
    %v156 = vmul.f32 %v92, %v92
    %v157 = vmul.f32 %v93, %v93
    %v158 = vmul.f32 %v94, %v94
    %v159 = vmul.f32 %v95, %v95
    %v160 = vmul.f32 %v96, %v96
    %v161 = vmul.f32 %v97, %v97
    %v162 = vadd.f32 %v146, %v147
    %v163 = vadd.f32 %v162, %v148
    %v164 = vadd.f32 %v163, %v149
    %v165 = vadd.f32 %v164, %v150
    %v166 = vadd.f32 %v165, %v151
    %v167 = vadd.f32 %v166, %v152
    %v168 = vadd.f32 %v167, %v153
    %v169 = vadd.f32 %v168, %v154
    %v170 = vadd.f32 %v169, %v155
    %v171 = vadd.f32 %v170, %v156
    %v172 = vadd.f32 %v171, %v157
    %v173 = vadd.f32 %v172, %v158
    %v174 = vadd.f32 %v173, %v159
    %v175 = vadd.f32 %v174, %v160
    %v176 = vadd.f32 %v175, %v161
    %v177 = vadd.f32 %v176, 0.0
    %v178 = vld [vmem:[#allocation7] sm:$0xff]
    %v179 = vadd.f32 %v178, %v145
    %180 = vst [vmem:[#allocation7] sm:$0xff] %v179
    %s181 = scalar_lea.vmem [#allocation7], 8
    %v182 = vld [vmem:[%s181] sm:$0xff]
    %v183 = vadd.f32 %v182, %v177
    %184 = vst [vmem:[%s181] sm:$0xff] %v183
    // Predicated region
    $region22: #{tpu_custom_call.1} parent=1 // pred_check
      _
    $region23: #{tpu_custom_call.1} parent=1 // pred_check_branch
      %186 = sbr.rel (0) target = $region25
    $region24: #{tpu_custom_call.1} parent=1 // pred_region
      %s188 = ssub.s32 256, 256
      %189 = vsyncadd [#allocation4], %s188
      %s190 = sshll.u32 [#allocation7], 4
      %s191 = int_to_ptr.vmem [resolvable:$true] %s190
      %196 = dma.vmem_to_hbm [thread:$0]  %s191, 256, %s2, [#allocation4], 128, 128, 8
    $region25: #{tpu_custom_call.1} parent=1 // pred_fallthru
      _
    // Predicated region
    $region26: #{tpu_custom_call.1} parent=1 // pred_check
      _
    $region27: #{tpu_custom_call.1} parent=1 // pred_check_branch
      %198 = sbr.rel (0) target = $region29
    $region28: #{tpu_custom_call.1} parent=1 // pred_region
      %199 = dma.done [#allocation4], 256
    $region29: #{tpu_custom_call.1} parent=1 // pred_fallthru
      _
    %200 = vsyncpa [#allocation3], 1
    %201 = vsyncpa [#allocation6], 1
    %202 = vsyncpa [#allocation4], 1

</llo_original>
